<compile_context>
chip_gen: v7x
topology: tpu7x:2x2x1
jax: 0.10.0
libtpu: 0.0.40
codegen_flags: <defaults>
</compile_context>

<pallas_src>
import math

import numpy as np
import jax
import jax.numpy as jnp
from jax.experimental import pallas as pl
from jax.experimental.pallas import tpu as pltpu

_HIGHEST = jax.lax.Precision.HIGHEST   # host/XLA-side constant folding only; the kernel uses DEFAULT


# ----------------------------- host-side constant prep -----------------------------

def _haar_filters(n):
    """(2, n//2, n) analysis rows: [0]=low (x[2k]+x[2k+1])/sqrt2, [1]=high (x[2k]-x[2k+1])/sqrt2."""
    assert n % 2 == 0
    h = np.zeros((2, n // 2, n), dtype=np.float32)
    r = 1.0 / math.sqrt(2.0)
    k = np.arange(n // 2)
    h[0, k, 2 * k] = r
    h[0, k, 2 * k + 1] = r
    h[1, k, 2 * k] = r
    h[1, k, 2 * k + 1] = -r
    return h


# band g -> (channel filter, length filter); order matches torch coefs = [LL, LH, HL, HH]
_FC = (0, 0, 1, 1)
_FL = (0, 1, 0, 1)


def _haar_operators(channel, length):
    """Dense Haar analysis / synthesis operators (numpy, built once per shape).

    A[(c*length + l), (g, j, m)]  = Hc_fc(g)[j, c] * Hl_fl(g)[m, l]      (CL x CL)
    S[(g, j, m), (l*channel + c)] = same value                           (CL x CL)
    so coef = x_flat @ A and out_flat = coef' @ S, with the output lanes already in the module's
    final (length, channel) flattened order (lane-dense stores, no in-kernel transposes).
    """
    c2, l2 = channel // 2, length // 2
    hc = _haar_filters(channel)            # (2, C2, channel)
    hl = _haar_filters(length)             # (2, L2, length)
    a_blocks, s_blocks = [], []
    for g in range(4):
        blk = np.einsum("jc,ml->cljm", hc[_FC[g]], hl[_FL[g]])
        a_blocks.append(blk.reshape(channel * length, c2 * l2))
        blk = np.einsum("jc,ml->jmlc", hc[_FC[g]], hl[_FL[g]])
        s_blocks.append(blk.reshape(c2 * l2, length * channel))
    A = np.concatenate(a_blocks, axis=1).astype(np.float32)    # (CL, CL)
    S = np.concatenate(s_blocks, axis=0).astype(np.float32)    # (CL, CL)
    return A, S


def _net_selection(batch):
    """(4, batch, 4) one-hot f32: sel[n, b, g] = 1 iff band-group g of batch row b uses net n.

    Reproduces torch.stack(yhs).view(3, batch, ...): the (b, band) high-pass coefficient is
    processed by net 1 + (3*b + band)//batch; the LL band (g=0) always uses net 0.
    """
    sel = np.zeros((4, batch, 4), dtype=np.float32)
    sel[0, :, 0] = 1.0
    for g in range(1, 4):
        for b in range(batch):
            sel[1 + (3 * b + (g - 1)) // batch, b, g] = 1.0
    return sel


def _effective_affine(weights, biases, layer):
    """Collapse `layer` applications of x -> x @ W.T + b into (W^T)^layer and b @ sum_i (W^T)^i."""
    wt = jnp.swapaxes(weights, 1, 2)                               # (4, L2, L2)
    g, l2, _ = wt.shape
    wt_eff = jnp.broadcast_to(jnp.eye(l2, dtype=weights.dtype), (g, l2, l2))
    b_eff = jnp.zeros((g, l2), dtype=biases.dtype)
    for _ in range(layer):
        b_eff = jnp.einsum("gi,gio->go", b_eff, wt, precision=_HIGHEST) + biases
        wt_eff = jnp.einsum("gij,gjk->gik", wt_eff, wt, precision=_HIGHEST)
    return wt_eff, b_eff


def _pick_tile(batch):
    """Batch tile (multiple of 8, <=256) and padded batch; prefer >=2 grid steps for megacore."""
    bp = -(-batch // 8) * 8
    tb = min(256, bp)
    if bp // tb < 2 and bp >= 16:
        tb = max(8, ((bp // 2) + 7) // 8 * 8)
    padded = -(-bp // tb) * tb
    return tb, padded


# ----------------------------- fused Pallas kernel -----------------------------

def _hmlp_kernel(x_ref, aw_ref, s_ref, bband_ref, bplace_ref, sel_ref, o_ref):
    """One grid step == one batch tile; two large MXU matmuls + a few VPU broadcasts.

    x_ref     : (TB, CL)        flattened input rows (channel*length lanes)
    aw_ref    : (CL, 4*CL)      Haar-analysis x collapsed-Linear, all 4 nets along lanes
    s_ref     : (CL, CL)        Haar synthesis into final (length, channel) lane order
    bband_ref : (4, CL)         band-group indicator rows
    bplace_ref: (4, CL)         per-net collapsed bias, placed per (band, channel-half) group
    sel_ref   : (4, TB, 4)      one-hot: [net, batch-row, band-group]
    o_ref     : (TB, CL)        output rows, lanes already in (length, channel) flat order
    """
    cl = aw_ref.shape[0]
    # 1) Haar analysis + collapsed Linear under all 4 nets: one matmul for the whole tile.
    ycat = jnp.dot(x_ref[...], aw_ref[...], preferred_element_type=jnp.float32)   # (TB, 4*CL)
    # 2) per-(row, band-group) one-hot net selection + bias (VPU broadcast-multiplies only).
    ysel = None
    for n in range(4):
        sel_n = sel_ref[n]                                     # (TB, 4)
        msk = sel_n[:, 0:1] * bband_ref[0:1, :]                # (TB, CL)
        for g in range(1, 4):
            msk = msk + sel_n[:, g:g + 1] * bband_ref[g:g + 1, :]
        term = msk * (ycat[:, n * cl:(n + 1) * cl] + bplace_ref[n:n + 1, :])
        ysel = term if ysel is None else ysel + term
    # 3) Haar synthesis straight into the module's final flattened layout.
    out = jnp.dot(ysel, s_ref[...], preferred_element_type=jnp.float32)           # (TB, L*C)
    o_ref[...] = out.astype(o_ref.dtype)


# ----------------------------- public forward -----------------------------

def hmlp_wo_rin_forward(x, weights, biases, layer):
    """x: (batch, channel, length) f32; weights: (4, L2, L2) torch (out,in); biases: (4, L2)."""
    batch, channel, length = x.shape
    # TODO(synk): odd channel/length with mode='zero' (extra zero-padded half band) not handled.
    assert channel % 2 == 0 and length % 2 == 0
    l2, c2 = length // 2, channel // 2
    cl = channel * length
    assert weights.shape == (4, l2, l2) and biases.shape == (4, l2)
    # TODO(synk): for channel*length >~ 1024 the fused dense Haar/Linear operators no longer fit
    # VMEM comfortably; a band-structured multi-matmul path would be needed at those sizes.

    # ---- host/XLA-side constant folding (tiny, once per call) ----
    wt_eff, b_eff = _effective_affine(weights, biases, layer)     # (4, L2, L2), (4, L2)
    A_np, S_np = _haar_operators(channel, length)
    A = jnp.asarray(A_np)                                         # (CL, CL)
    S = jnp.asarray(S_np)                                         # (CL, CL)
    # Fuse analysis with the collapsed Linear of every net; concat nets along output lanes.
    AW = jnp.einsum("xgm,nmo->xngo", A.reshape(cl, 4 * c2, l2), wt_eff,
                    precision=_HIGHEST).reshape(cl, 4 * cl)       # (CL, 4*CL)
    bplace = jnp.tile(b_eff, (1, 4 * c2))                         # (4, CL)
    bband = jnp.asarray(np.repeat(np.eye(4, dtype=np.float32), c2 * l2, axis=1))   # (4, CL)
    sel_np = _net_selection(batch)                                # (4, batch, 4)

    # ---- batch tiling ----
    tb, padded = _pick_tile(batch)
    x2 = x.reshape(batch, cl)
    if padded != batch:
        x2 = jnp.pad(x2, ((0, padded - batch), (0, 0)))
        sel_np = np.pad(sel_np, ((0, 0), (0, padded - batch), (0, 0)))
    sel = jnp.asarray(sel_np)
    grid = (padded // tb,)

    vmem_need = 4 * (4 * tb * cl + cl * 4 * cl + cl * cl + 8 * cl + 2 * 4 * tb * 4)
    out2 = pl.pallas_call(
        _hmlp_kernel,
        out_shape=jax.ShapeDtypeStruct((padded, cl), x.dtype),
        grid=grid,
        in_specs=[
            pl.BlockSpec((tb, cl), lambda i: (i, 0)),             # x tile
            pl.BlockSpec((cl, 4 * cl), lambda i: (0, 0)),         # AW      (resident constant)
            pl.BlockSpec((cl, cl), lambda i: (0, 0)),             # S       (resident constant)
            pl.BlockSpec((4, cl), lambda i: (0, 0)),              # band indicator
            pl.BlockSpec((4, cl), lambda i: (0, 0)),              # placed biases
            pl.BlockSpec((4, tb, 4), lambda i: (0, i, 0)),        # per-row net one-hot
        ],
        out_specs=pl.BlockSpec((tb, cl), lambda i: (i, 0)),
        compiler_params=pltpu.CompilerParams(
            dimension_semantics=("parallel",),
            vmem_limit_bytes=int(min(48 * 2 ** 20, max(16 * 2 ** 20, 2 * vmem_need))),
        ),
    )(x2, AW, S, bband, bplace, sel)

    return out2[:batch].reshape(batch, length, channel)


# ----------------------------- pure-JAX reference (mirrors torch) -----------------------------

def hmlp_wo_rin_reference(x, weights, biases, layer):
    batch, channel, length = x.shape
    l2, ch2 = length // 2, channel // 2
    xh = jnp.transpose(x, (0, 2, 1))                       # (batch, H=length, W=channel)
    a = xh[:, 0::2, 0::2]
    b = xh[:, 0::2, 1::2]
    c = xh[:, 1::2, 0::2]
    d = xh[:, 1::2, 1::2]
    ll = 0.5 * (a + b + c + d)
    lh = 0.5 * (a + b - c - d)
    hl = 0.5 * (a - b + c - d)
    hh = 0.5 * (a - b - c + d)
    yl = ll[None]
    yh = jnp.stack([lh, hl, hh], axis=1)[None]             # (1, batch, 3, L2, C2)
    yhs_s = yh.reshape(3, batch, l2, ch2)                  # torch.stack(yhs).view(...)
    coefs = jnp.concatenate([yl, yhs_s], axis=0)           # (4, batch, L2, C2)
    coefs_t = jnp.transpose(coefs, (0, 1, 3, 2))           # (4, batch, C2, L2)
    wt = jnp.swapaxes(weights, 1, 2)
    new_t = coefs_t
    for _ in range(layer):                                 # sequential LinearLayer (reference)
        new_t = jnp.einsum("gbml,glo->gbmo", new_t, wt,
                           precision=_HIGHEST) + biases[:, None, None, :]
    coefs_new = jnp.transpose(new_t, (0, 1, 3, 2))         # (4, batch, L2, C2)
    ll2 = coefs_new[0]
    yh_new = coefs_new[1:].reshape(batch, 3, l2, ch2)      # inverse remix
    lh2, hl2, hh2 = yh_new[:, 0], yh_new[:, 1], yh_new[:, 2]
    s_a = 0.5 * (ll2 + lh2 + hl2 + hh2)
    s_b = 0.5 * (ll2 + lh2 - hl2 - hh2)
    s_c = 0.5 * (ll2 - lh2 + hl2 - hh2)
    s_d = 0.5 * (ll2 - lh2 - hl2 + hh2)
    out = jnp.zeros((batch, length, channel), x.dtype)
    out = out.at[:, 0::2, 0::2].set(s_a)
    out = out.at[:, 0::2, 1::2].set(s_b)
    out = out.at[:, 1::2, 0::2].set(s_c)
    out = out.at[:, 1::2, 1::2].set(s_d)
    return out


# ----------------------------- demo -----------------------------

if __name__ == "__main__":
    batch, channel, length = 16, 4, 16                     # config.win_size == length == 16
    layer = 3                                              # config.layer
    l2 = length // 2

    key = jax.random.PRNGKey(0)
    kx, kw, kb = jax.random.split(key, 3)
    x = jax.random.normal(kx, (batch, channel, length), dtype=jnp.float32)

    # 4 nets (decompose_layer + 1), each nn.Linear(L2, L2):
    #   weight ~ xavier_uniform: U(+-sqrt(6/(L2+L2)));  bias ~ torch default: U(+-1/sqrt(L2))
    wb = math.sqrt(6.0 / (l2 + l2))
    bb = 1.0 / math.sqrt(l2)
    weights = jax.random.uniform(kw, (4, l2, l2), jnp.float32, -wb, wb)   # torch (out, in) layout
    biases = jax.random.uniform(kb, (4, l2), jnp.float32, -bb, bb)

    fwd = jax.jit(hmlp_wo_rin_forward, static_argnums=(3,))
    out = jax.block_until_ready(fwd(x, weights, biases, layer))

    ref = hmlp_wo_rin_reference(x, weights, biases, layer)
    assert out.shape == (batch, length, channel), out.shape
    err = float(jnp.max(jnp.abs(out - ref)))
    # In-kernel dots run at default MXU precision (HIGHEST dropped per perf review), so allow a
    # bf16-operand-level tolerance vs the f32 reference.
    assert jnp.allclose(out, ref, atol=5e-2, rtol=5e-2), f"max abs err {err}"
    print("KERNEL_OK")
</pallas_src>

<mosaic_0001>
module attributes {stable_mosaic.version = 11 : i64} {
  func.func @_hmlp_kernel(%arg0: i32, %arg1: memref<8x64xf32, #tpu.memory_space<vmem>>, %arg2: memref<64x256xf32, #tpu.memory_space<vmem>>, %arg3: memref<64x64xf32, #tpu.memory_space<vmem>>, %arg4: memref<4x64xf32, #tpu.memory_space<vmem>>, %arg5: memref<4x64xf32, #tpu.memory_space<vmem>>, %arg6: memref<4x8x4xf32, #tpu.memory_space<vmem>>, %arg7: memref<8x64xf32, #tpu.memory_space<vmem>>) attributes {dimension_semantics = [#tpu.dimension_semantics<parallel>], iteration_bounds = array<i64: 2>, scalar_prefetch = 0 : i64, scratch_operands = 0 : i64, tpu.core_type = #tpu.core_type<tc>, window_params = [{transform_indices = @transform_0, window_bounds = array<i64: 8, 64>}, {pipeline_mode = #tpu.pipeline_mode<synchronous>, transform_indices = @transform_1, window_bounds = array<i64: 64, 256>}, {pipeline_mode = #tpu.pipeline_mode<synchronous>, transform_indices = @transform_2, window_bounds = array<i64: 64, 64>}, {pipeline_mode = #tpu.pipeline_mode<synchronous>, transform_indices = @transform_3, window_bounds = array<i64: 4, 64>}, {pipeline_mode = #tpu.pipeline_mode<synchronous>, transform_indices = @transform_4, window_bounds = array<i64: 4, 64>}, {transform_indices = @transform_5, window_bounds = array<i64: 4, 8, 4>}, {transform_indices = @transform_6, window_bounds = array<i64: 8, 64>}]} {
    %c0 = arith.constant 0 : index
    %c0_0 = arith.constant 0 : index
    %0 = vector.load %arg1[%c0, %c0_0] : memref<8x64xf32, #tpu.memory_space<vmem>>, vector<8x64xf32>
    %c0_1 = arith.constant 0 : index
    %c0_2 = arith.constant 0 : index
    %1 = vector.load %arg2[%c0_1, %c0_2] : memref<64x256xf32, #tpu.memory_space<vmem>>, vector<64x256xf32>
    %cst = arith.constant dense<0.000000e+00> : vector<8x256xf32>
    %2 = tpu.matmul %0, %1, %cst {dimension_numbers = #tpu.dot_dimension_numbers<[1], [0], [0], [1], [0, 0, 1, 1], [], []>} : vector<8x64xf32>, vector<64x256xf32>, vector<8x256xf32> -> vector<8x256xf32>
    %c0_3 = arith.constant 0 : index
    %c0_4 = arith.constant 0 : index
    %c0_5 = arith.constant 0 : index
    %3 = vector.load %arg6[%c0_3, %c0_4, %c0_5] : memref<4x8x4xf32, #tpu.memory_space<vmem>>, vector<1x8x4xf32>
    %4 = vector.shape_cast %3 : vector<1x8x4xf32> to vector<8x4xf32>
    %5 = vector.extract_strided_slice %4 {offsets = [0, 0], sizes = [8, 1], strides = [1, 1]} : vector<8x4xf32> to vector<8x1xf32>
    %c0_6 = arith.constant 0 : index
    %c0_7 = arith.constant 0 : index
    %6 = vector.load %arg4[%c0_6, %c0_7] : memref<4x64xf32, #tpu.memory_space<vmem>>, vector<1x64xf32>
    %7 = vector.broadcast %5 : vector<8x1xf32> to vector<8x64xf32>
    %8 = vector.broadcast %6 : vector<1x64xf32> to vector<8x64xf32>
    %9 = arith.mulf %7, %8 : vector<8x64xf32>
    %10 = vector.extract_strided_slice %4 {offsets = [0, 1], sizes = [8, 1], strides = [1, 1]} : vector<8x4xf32> to vector<8x1xf32>
    %c1 = arith.constant 1 : index
    %c0_8 = arith.constant 0 : index
    %11 = vector.load %arg4[%c1, %c0_8] : memref<4x64xf32, #tpu.memory_space<vmem>>, vector<1x64xf32>
    %12 = vector.broadcast %10 : vector<8x1xf32> to vector<8x64xf32>
    %13 = vector.broadcast %11 : vector<1x64xf32> to vector<8x64xf32>
    %14 = arith.mulf %12, %13 : vector<8x64xf32>
    %15 = arith.addf %9, %14 : vector<8x64xf32>
    %16 = vector.extract_strided_slice %4 {offsets = [0, 2], sizes = [8, 1], strides = [1, 1]} : vector<8x4xf32> to vector<8x1xf32>
    %c2 = arith.constant 2 : index
    %c0_9 = arith.constant 0 : index
    %17 = vector.load %arg4[%c2, %c0_9] : memref<4x64xf32, #tpu.memory_space<vmem>>, vector<1x64xf32>
    %18 = vector.broadcast %16 : vector<8x1xf32> to vector<8x64xf32>
    %19 = vector.broadcast %17 : vector<1x64xf32> to vector<8x64xf32>
    %20 = arith.mulf %18, %19 : vector<8x64xf32>
    %21 = arith.addf %15, %20 : vector<8x64xf32>
    %22 = vector.extract_strided_slice %4 {offsets = [0, 3], sizes = [8, 1], strides = [1, 1]} : vector<8x4xf32> to vector<8x1xf32>
    %c3 = arith.constant 3 : index
    %c0_10 = arith.constant 0 : index
    %23 = vector.load %arg4[%c3, %c0_10] : memref<4x64xf32, #tpu.memory_space<vmem>>, vector<1x64xf32>
    %24 = vector.broadcast %22 : vector<8x1xf32> to vector<8x64xf32>
    %25 = vector.broadcast %23 : vector<1x64xf32> to vector<8x64xf32>
    %26 = arith.mulf %24, %25 : vector<8x64xf32>
    %27 = arith.addf %21, %26 : vector<8x64xf32>
    %28 = vector.extract_strided_slice %2 {offsets = [0, 0], sizes = [8, 64], strides = [1, 1]} : vector<8x256xf32> to vector<8x64xf32>
    %c0_11 = arith.constant 0 : index
    %c0_12 = arith.constant 0 : index
    %29 = vector.load %arg5[%c0_11, %c0_12] : memref<4x64xf32, #tpu.memory_space<vmem>>, vector<1x64xf32>
    %30 = vector.broadcast %29 : vector<1x64xf32> to vector<8x64xf32>
    %31 = arith.addf %28, %30 : vector<8x64xf32>
    %32 = arith.mulf %27, %31 : vector<8x64xf32>
    %c1_13 = arith.constant 1 : index
    %c0_14 = arith.constant 0 : index
    %c0_15 = arith.constant 0 : index
    %33 = vector.load %arg6[%c1_13, %c0_14, %c0_15] : memref<4x8x4xf32, #tpu.memory_space<vmem>>, vector<1x8x4xf32>
    %34 = vector.shape_cast %33 : vector<1x8x4xf32> to vector<8x4xf32>
    %35 = vector.extract_strided_slice %34 {offsets = [0, 0], sizes = [8, 1], strides = [1, 1]} : vector<8x4xf32> to vector<8x1xf32>
    %c0_16 = arith.constant 0 : index
    %c0_17 = arith.constant 0 : index
    %36 = vector.load %arg4[%c0_16, %c0_17] : memref<4x64xf32, #tpu.memory_space<vmem>>, vector<1x64xf32>
    %37 = vector.broadcast %35 : vector<8x1xf32> to vector<8x64xf32>
    %38 = vector.broadcast %36 : vector<1x64xf32> to vector<8x64xf32>
    %39 = arith.mulf %37, %38 : vector<8x64xf32>
    %40 = vector.extract_strided_slice %34 {offsets = [0, 1], sizes = [8, 1], strides = [1, 1]} : vector<8x4xf32> to vector<8x1xf32>
    %c1_18 = arith.constant 1 : index
    %c0_19 = arith.constant 0 : index
    %41 = vector.load %arg4[%c1_18, %c0_19] : memref<4x64xf32, #tpu.memory_space<vmem>>, vector<1x64xf32>
    %42 = vector.broadcast %40 : vector<8x1xf32> to vector<8x64xf32>
    %43 = vector.broadcast %41 : vector<1x64xf32> to vector<8x64xf32>
    %44 = arith.mulf %42, %43 : vector<8x64xf32>
    %45 = arith.addf %39, %44 : vector<8x64xf32>
    %46 = vector.extract_strided_slice %34 {offsets = [0, 2], sizes = [8, 1], strides = [1, 1]} : vector<8x4xf32> to vector<8x1xf32>
    %c2_20 = arith.constant 2 : index
    %c0_21 = arith.constant 0 : index
    %47 = vector.load %arg4[%c2_20, %c0_21] : memref<4x64xf32, #tpu.memory_space<vmem>>, vector<1x64xf32>
    %48 = vector.broadcast %46 : vector<8x1xf32> to vector<8x64xf32>
    %49 = vector.broadcast %47 : vector<1x64xf32> to vector<8x64xf32>
    %50 = arith.mulf %48, %49 : vector<8x64xf32>
    %51 = arith.addf %45, %50 : vector<8x64xf32>
    %52 = vector.extract_strided_slice %34 {offsets = [0, 3], sizes = [8, 1], strides = [1, 1]} : vector<8x4xf32> to vector<8x1xf32>
    %c3_22 = arith.constant 3 : index
    %c0_23 = arith.constant 0 : index
    %53 = vector.load %arg4[%c3_22, %c0_23] : memref<4x64xf32, #tpu.memory_space<vmem>>, vector<1x64xf32>
    %54 = vector.broadcast %52 : vector<8x1xf32> to vector<8x64xf32>
    %55 = vector.broadcast %53 : vector<1x64xf32> to vector<8x64xf32>
    %56 = arith.mulf %54, %55 : vector<8x64xf32>
    %57 = arith.addf %51, %56 : vector<8x64xf32>
    %58 = vector.extract_strided_slice %2 {offsets = [0, 64], sizes = [8, 64], strides = [1, 1]} : vector<8x256xf32> to vector<8x64xf32>
    %c1_24 = arith.constant 1 : index
    %c0_25 = arith.constant 0 : index
    %59 = vector.load %arg5[%c1_24, %c0_25] : memref<4x64xf32, #tpu.memory_space<vmem>>, vector<1x64xf32>
    %60 = vector.broadcast %59 : vector<1x64xf32> to vector<8x64xf32>
    %61 = arith.addf %58, %60 : vector<8x64xf32>
    %62 = arith.mulf %57, %61 : vector<8x64xf32>
    %63 = arith.addf %32, %62 : vector<8x64xf32>
    %c2_26 = arith.constant 2 : index
    %c0_27 = arith.constant 0 : index
    %c0_28 = arith.constant 0 : index
    %64 = vector.load %arg6[%c2_26, %c0_27, %c0_28] : memref<4x8x4xf32, #tpu.memory_space<vmem>>, vector<1x8x4xf32>
    %65 = vector.shape_cast %64 : vector<1x8x4xf32> to vector<8x4xf32>
    %66 = vector.extract_strided_slice %65 {offsets = [0, 0], sizes = [8, 1], strides = [1, 1]} : vector<8x4xf32> to vector<8x1xf32>
    %c0_29 = arith.constant 0 : index
    %c0_30 = arith.constant 0 : index
    %67 = vector.load %arg4[%c0_29, %c0_30] : memref<4x64xf32, #tpu.memory_space<vmem>>, vector<1x64xf32>
    %68 = vector.broadcast %66 : vector<8x1xf32> to vector<8x64xf32>
    %69 = vector.broadcast %67 : vector<1x64xf32> to vector<8x64xf32>
    %70 = arith.mulf %68, %69 : vector<8x64xf32>
    %71 = vector.extract_strided_slice %65 {offsets = [0, 1], sizes = [8, 1], strides = [1, 1]} : vector<8x4xf32> to vector<8x1xf32>
    %c1_31 = arith.constant 1 : index
    %c0_32 = arith.constant 0 : index
    %72 = vector.load %arg4[%c1_31, %c0_32] : memref<4x64xf32, #tpu.memory_space<vmem>>, vector<1x64xf32>
    %73 = vector.broadcast %71 : vector<8x1xf32> to vector<8x64xf32>
    %74 = vector.broadcast %72 : vector<1x64xf32> to vector<8x64xf32>
    %75 = arith.mulf %73, %74 : vector<8x64xf32>
    %76 = arith.addf %70, %75 : vector<8x64xf32>
    %77 = vector.extract_strided_slice %65 {offsets = [0, 2], sizes = [8, 1], strides = [1, 1]} : vector<8x4xf32> to vector<8x1xf32>
    %c2_33 = arith.constant 2 : index
    %c0_34 = arith.constant 0 : index
    %78 = vector.load %arg4[%c2_33, %c0_34] : memref<4x64xf32, #tpu.memory_space<vmem>>, vector<1x64xf32>
    %79 = vector.broadcast %77 : vector<8x1xf32> to vector<8x64xf32>
    %80 = vector.broadcast %78 : vector<1x64xf32> to vector<8x64xf32>
    %81 = arith.mulf %79, %80 : vector<8x64xf32>
    %82 = arith.addf %76, %81 : vector<8x64xf32>
    %83 = vector.extract_strided_slice %65 {offsets = [0, 3], sizes = [8, 1], strides = [1, 1]} : vector<8x4xf32> to vector<8x1xf32>
    %c3_35 = arith.constant 3 : index
    %c0_36 = arith.constant 0 : index
    %84 = vector.load %arg4[%c3_35, %c0_36] : memref<4x64xf32, #tpu.memory_space<vmem>>, vector<1x64xf32>
    %85 = vector.broadcast %83 : vector<8x1xf32> to vector<8x64xf32>
    %86 = vector.broadcast %84 : vector<1x64xf32> to vector<8x64xf32>
    %87 = arith.mulf %85, %86 : vector<8x64xf32>
    %88 = arith.addf %82, %87 : vector<8x64xf32>
    %89 = vector.extract_strided_slice %2 {offsets = [0, 128], sizes = [8, 64], strides = [1, 1]} : vector<8x256xf32> to vector<8x64xf32>
    %c2_37 = arith.constant 2 : index
    %c0_38 = arith.constant 0 : index
    %90 = vector.load %arg5[%c2_37, %c0_38] : memref<4x64xf32, #tpu.memory_space<vmem>>, vector<1x64xf32>
    %91 = vector.broadcast %90 : vector<1x64xf32> to vector<8x64xf32>
    %92 = arith.addf %89, %91 : vector<8x64xf32>
    %93 = arith.mulf %88, %92 : vector<8x64xf32>
    %94 = arith.addf %63, %93 : vector<8x64xf32>
    %c3_39 = arith.constant 3 : index
    %c0_40 = arith.constant 0 : index
    %c0_41 = arith.constant 0 : index
    %95 = vector.load %arg6[%c3_39, %c0_40, %c0_41] : memref<4x8x4xf32, #tpu.memory_space<vmem>>, vector<1x8x4xf32>
    %96 = vector.shape_cast %95 : vector<1x8x4xf32> to vector<8x4xf32>
    %97 = vector.extract_strided_slice %96 {offsets = [0, 0], sizes = [8, 1], strides = [1, 1]} : vector<8x4xf32> to vector<8x1xf32>
    %c0_42 = arith.constant 0 : index
    %c0_43 = arith.constant 0 : index
    %98 = vector.load %arg4[%c0_42, %c0_43] : memref<4x64xf32, #tpu.memory_space<vmem>>, vector<1x64xf32>
    %99 = vector.broadcast %97 : vector<8x1xf32> to vector<8x64xf32>
    %100 = vector.broadcast %98 : vector<1x64xf32> to vector<8x64xf32>
    %101 = arith.mulf %99, %100 : vector<8x64xf32>
    %102 = vector.extract_strided_slice %96 {offsets = [0, 1], sizes = [8, 1], strides = [1, 1]} : vector<8x4xf32> to vector<8x1xf32>
    %c1_44 = arith.constant 1 : index
    %c0_45 = arith.constant 0 : index
    %103 = vector.load %arg4[%c1_44, %c0_45] : memref<4x64xf32, #tpu.memory_space<vmem>>, vector<1x64xf32>
    %104 = vector.broadcast %102 : vector<8x1xf32> to vector<8x64xf32>
    %105 = vector.broadcast %103 : vector<1x64xf32> to vector<8x64xf32>
    %106 = arith.mulf %104, %105 : vector<8x64xf32>
    %107 = arith.addf %101, %106 : vector<8x64xf32>
    %108 = vector.extract_strided_slice %96 {offsets = [0, 2], sizes = [8, 1], strides = [1, 1]} : vector<8x4xf32> to vector<8x1xf32>
    %c2_46 = arith.constant 2 : index
    %c0_47 = arith.constant 0 : index
    %109 = vector.load %arg4[%c2_46, %c0_47] : memref<4x64xf32, #tpu.memory_space<vmem>>, vector<1x64xf32>
    %110 = vector.broadcast %108 : vector<8x1xf32> to vector<8x64xf32>
    %111 = vector.broadcast %109 : vector<1x64xf32> to vector<8x64xf32>
    %112 = arith.mulf %110, %111 : vector<8x64xf32>
    %113 = arith.addf %107, %112 : vector<8x64xf32>
    %114 = vector.extract_strided_slice %96 {offsets = [0, 3], sizes = [8, 1], strides = [1, 1]} : vector<8x4xf32> to vector<8x1xf32>
    %c3_48 = arith.constant 3 : index
    %c0_49 = arith.constant 0 : index
    %115 = vector.load %arg4[%c3_48, %c0_49] : memref<4x64xf32, #tpu.memory_space<vmem>>, vector<1x64xf32>
    %116 = vector.broadcast %114 : vector<8x1xf32> to vector<8x64xf32>
    %117 = vector.broadcast %115 : vector<1x64xf32> to vector<8x64xf32>
    %118 = arith.mulf %116, %117 : vector<8x64xf32>
    %119 = arith.addf %113, %118 : vector<8x64xf32>
    %120 = vector.extract_strided_slice %2 {offsets = [0, 192], sizes = [8, 64], strides = [1, 1]} : vector<8x256xf32> to vector<8x64xf32>
    %c3_50 = arith.constant 3 : index
    %c0_51 = arith.constant 0 : index
    %121 = vector.load %arg5[%c3_50, %c0_51] : memref<4x64xf32, #tpu.memory_space<vmem>>, vector<1x64xf32>
    %122 = vector.broadcast %121 : vector<1x64xf32> to vector<8x64xf32>
    %123 = arith.addf %120, %122 : vector<8x64xf32>
    %124 = arith.mulf %119, %123 : vector<8x64xf32>
    %125 = arith.addf %94, %124 : vector<8x64xf32>
    %c0_52 = arith.constant 0 : index
    %c0_53 = arith.constant 0 : index
    %126 = vector.load %arg3[%c0_52, %c0_53] : memref<64x64xf32, #tpu.memory_space<vmem>>, vector<64x64xf32>
    %cst_54 = arith.constant dense<0.000000e+00> : vector<8x64xf32>
    %127 = tpu.matmul %125, %126, %cst_54 {dimension_numbers = #tpu.dot_dimension_numbers<[1], [0], [0], [1], [0, 0, 1, 1], [], []>} : vector<8x64xf32>, vector<64x64xf32>, vector<8x64xf32> -> vector<8x64xf32>
    %c0_55 = arith.constant 0 : index
    %c0_56 = arith.constant 0 : index
    %128 = vector.load %arg7[%c0_55, %c0_56] : memref<8x64xf32, #tpu.memory_space<vmem>>, vector<8x64xf32>
    tpu.vector_store %arg7[%c0_55, %c0_56], %127 {strides = array<i32>} : memref<8x64xf32, #tpu.memory_space<vmem>>, vector<8x64xf32>,
    return
  }
  func.func @transform_0(%arg0: i32) -> (i32, i32) {
    %c0_i32 = arith.constant 0 : i32
    %c0_i32_0 = arith.constant 0 : i32
    return %arg0, %c0_i32 : i32, i32
  }
  func.func @transform_1(%arg0: i32) -> (i32, i32) {
    %c0_i32 = arith.constant 0 : i32
    %c0_i32_0 = arith.constant 0 : i32
    %c0_i32_1 = arith.constant 0 : i32
    return %c0_i32, %c0_i32_0 : i32, i32
  }
  func.func @transform_2(%arg0: i32) -> (i32, i32) {
    %c0_i32 = arith.constant 0 : i32
    %c0_i32_0 = arith.constant 0 : i32
    %c0_i32_1 = arith.constant 0 : i32
    return %c0_i32, %c0_i32_0 : i32, i32
  }
  func.func @transform_3(%arg0: i32) -> (i32, i32) {
    %c0_i32 = arith.constant 0 : i32
    %c0_i32_0 = arith.constant 0 : i32
    %c0_i32_1 = arith.constant 0 : i32
    return %c0_i32, %c0_i32_0 : i32, i32
  }
  func.func @transform_4(%arg0: i32) -> (i32, i32) {
    %c0_i32 = arith.constant 0 : i32
    %c0_i32_0 = arith.constant 0 : i32
    %c0_i32_1 = arith.constant 0 : i32
    return %c0_i32, %c0_i32_0 : i32, i32
  }
  func.func @transform_5(%arg0: i32) -> (i32, i32, i32) {
    %c0_i32 = arith.constant 0 : i32
    %c0_i32_0 = arith.constant 0 : i32
    %c0_i32_1 = arith.constant 0 : i32
    return %c0_i32, %arg0, %c0_i32_0 : i32, i32, i32
  }
  func.func @transform_6(%arg0: i32) -> (i32, i32) {
    %c0_i32 = arith.constant 0 : i32
    %c0_i32_0 = arith.constant 0 : i32
    return %arg0, %c0_i32 : i32, i32
  }
}

</mosaic_0001>

<llo_original>
// kernel: tile.9
$region0: #{tile.9}
  %s0 = inlined_call_operand.vmem [shape: f32[4,8,8], index: 0, kind: input, shape index: {}]
  %s1 = inlined_call_operand.vmem [shape: f32[4,64], index: 1, kind: output, shape index: {}]
  $region1: #{tile.9} parent=0
    #allocation0 [shape = 'u8[4096]{0}', space=vmem, size = 0x1000, scoped, tag = 'scoped mem for output reshape']
    %v2 = vld [vmem:[%s0] ss:$8 sm:$0xf]
    %vm3 = vcmask 64512
    %4 = vst.msk [vmem:[#allocation0] sm:$0xf] %vm3, %v2
    %s5 = scalar_lea.vmem %s0, 7
    %v6 = vld [vmem:[%s5] ss:$8 sm:$0xf]
    %7 = vrot.lane.b32.xlu0 %v6, 56
    %v8 = vpop.permute.xlu0 %7
    %vm9 = vcmask 523712
    %10 = vst.msk [vmem:[#allocation0] sm:$0xf] %vm9, %v8
    %s11 = scalar_lea.vmem %s0, 6
    %v12 = vld [vmem:[%s11] ss:$8 sm:$0xf]
    %13 = vrot.lane.b32.xlu0 %v12, 48
    %v14 = vpop.permute.xlu0 %13
    %vm15 = vcmask 458112
    %16 = vst.msk [vmem:[#allocation0] sm:$0xf] %vm15, %v14
    %s17 = scalar_lea.vmem %s0, 5
    %v18 = vld [vmem:[%s17] ss:$8 sm:$0xf]
    %19 = vrot.lane.b32.xlu0 %v18, 40
    %v20 = vpop.permute.xlu0 %19
    %vm21 = vcmask 392512
    %22 = vst.msk [vmem:[#allocation0] sm:$0xf] %vm21, %v20
    %s23 = scalar_lea.vmem %s0, 4
    %v24 = vld [vmem:[%s23] ss:$8 sm:$0xf]
    %25 = vrot.lane.b32.xlu0 %v24, 32
    %v26 = vpop.permute.xlu0 %25
    %vm27 = vcmask 326912
    %28 = vst.msk [vmem:[#allocation0] sm:$0xf] %vm27, %v26
    %s29 = scalar_lea.vmem %s0, 3
    %v30 = vld [vmem:[%s29] ss:$8 sm:$0xf]
    %31 = vrot.lane.b32.xlu0 %v30, 24
    %v32 = vpop.permute.xlu0 %31
    %vm33 = vcmask 261312
    %34 = vst.msk [vmem:[#allocation0] sm:$0xf] %vm33, %v32
    %s35 = scalar_lea.vmem %s0, 2
    %v36 = vld [vmem:[%s35] ss:$8 sm:$0xf]
    %37 = vrot.lane.b32.xlu0 %v36, 16
    %v38 = vpop.permute.xlu0 %37
    %vm39 = vcmask 195712
    %40 = vst.msk [vmem:[#allocation0] sm:$0xf] %vm39, %v38
    %s41 = scalar_lea.vmem %s0, 1
    %v42 = vld [vmem:[%s41] ss:$8 sm:$0xf]
    %43 = vrot.lane.b32.xlu0 %v42, 8
    %v44 = vpop.permute.xlu0 %43
    %vm45 = vcmask 130112
    %46 = vst.msk [vmem:[#allocation0] sm:$0xf] %vm45, %v44
    %s48 = sshllo.u32 0, 4
    %v50 = vld [vmem:[#allocation0] sm:%s48]
    %s51 = sshllo.u32 0, 4
    %52 = vst [vmem:[%s1] sm:%s51] %v50

// kernel: hmlp_wo_rin_forward.1
$region0: #{hmlp_wo_rin_forward.1}
  #allocation0 [shape = 'u32[]', space=smem, size = 0x4, offset = 0x4, fixed_abs, tag = 'smem constant byte address 0x4 - core index']
  #allocation1 [shape = 'u32[144,128]{1,0:T(1,128)}', space=vmem, size = 0x12000, scoped, tag = 'internal scratch']
  %s0 = inlined_call_operand.vmem [shape: f32[16,64], index: 0, kind: input, shape index: {}]
  %s1 = inlined_call_operand.vmem [shape: f32[64,256], index: 1, kind: input, shape index: {}]
  %s2 = inlined_call_operand.vmem [shape: f32[64,64], index: 2, kind: input, shape index: {}]
  %s3 = inlined_call_operand.vmem [shape: f32[4,64], index: 3, kind: input, shape index: {}]
  %s4 = inlined_call_operand.vmem [shape: f32[4,64], index: 4, kind: input, shape index: {}]
  %s5 = inlined_call_operand.vmem [shape: f32[4,16,4], index: 5, kind: input, shape index: {}]
  %s6 = inlined_call_operand.vmem [shape: f32[16,64], index: 6, kind: output, shape index: {}]
  %s7 = sld [smem:[#allocation0]]
  $region95: #{hmlp_wo_rin_forward.1} parent=0
    _
  %s9 = ssub.s32 1, %s7
  %s10 = scalar_select 0, %s9, %s7
  $region1: #{hmlp_wo_rin_forward.1} parent=0
    #allocation2 [shape = 'u8[32768]{0}', space=vmem, size = 0x8000, scoped, tag = 'input window, operand 5']
    loop: start=0, step=1, limit=4
    $region2: #{hmlp_wo_rin_forward.1} parent=1 // loop_pre_header
      _
    $region3: #{hmlp_wo_rin_forward.1} parent=1 // loop_header
      %s12 = sphi 0, %s16
      %p13 = scmp.ge.s32.totalorder %s12, 4
      %s22 = sphi 0, %s24
      %s25 = sphi 0, %s22
      %s26 = sphi 0, %s25
      %s42 = sphi 0, %s26
      %s46 = sphi 0, %s46
      %s48 = sphi 0, %s46
      %s49 = sphi 0, %s48
      %s63 = sphi 0, %s49
      %s67 = sphi 0, %s67
      %s69 = sphi 0, %s67
      %s70 = sphi 0, %s69
      %s84 = sphi 0, %s70
      %s88 = sphi 0, %s88
      %s90 = sphi 0, %s88
      %s91 = sphi 0, %s90
      %s105 = sphi 0, %s91
      %s109 = sphi 0, %s109
      %s111 = sphi 0, %s109
      %s112 = sphi 0, %s111
      %s126 = sphi 0, %s112
      %s132 = sphi 0, %s134
      %s135 = sphi 0, %s132
      %s136 = sphi 0, %s135
      %s152 = sphi 0, %s136
      %s158 = sphi 0, %s160
      %s161 = sphi 0, %s158
      %s162 = sphi 0, %s161
      %s178 = sphi 0, %s162
    $region4: #{hmlp_wo_rin_forward.1} parent=1 // loop_header_branch
      %15 = sbr.rel (%p13) target = $region8
    $region5: #{hmlp_wo_rin_forward.1} parent=1 // loop_body
      %s17 = ssub.s32 %s12, 1
      %s18 = ssub.s32 %s12, 2
      %s19 = sadd.s32 %s12, 1
      %s20 = ssub.s32 %s12, %s19
      %p21 = scmp.eq.s32.totalorder %s20, 0
      %s23 = sadd.s32 %s22, 1
      %s24 = scalar_select %p21, %s22, %s23
      %p27 = pneg %p21
      %p28 = scmp.eq.s32.totalorder %s12, 1
      %p29 = por %p27, %p28
      %p30 = scmp.ne.s32.totalorder %s22, %s25
      %p31 = scmp.eq.s32.totalorder %s12, 0
      %p32 = por %p30, %p31
      %p33 = scmp.ne.s32.totalorder %s22, %s25
      %p34 = scmp.eq.s32.totalorder %s17, 1
      %p35 = por %p33, %p34
      %p36 = scmp.ne.s32.totalorder %s25, %s26
      %p37 = scmp.eq.s32.totalorder %s17, 0
      %p38 = por %p36, %p37
      %p39 = scmp.ne.s32.totalorder %s25, %s26
      %p40 = scmp.eq.s32.totalorder %s18, 1
      %p41 = por %p39, %p40
      %p43 = scmp.ne.s32.totalorder %s26, %s42
      %p44 = scmp.eq.s32.totalorder %s18, 0
      %p45 = por %p43, %p44
      %s47 = sadd.s32 %s46, 1
      %p50 = scmp.eq.s32.totalorder %s12, 1
      %p51 = scmp.ne.s32.totalorder %s46, %s48
      %p52 = scmp.eq.s32.totalorder %s12, 0
      %p53 = por %p51, %p52
      %p54 = scmp.ne.s32.totalorder %s46, %s48
      %p55 = scmp.eq.s32.totalorder %s17, 1
      %p56 = por %p54, %p55
      %p57 = scmp.ne.s32.totalorder %s48, %s49
      %p58 = scmp.eq.s32.totalorder %s17, 0
      %p59 = por %p57, %p58
      %p60 = scmp.ne.s32.totalorder %s48, %s49
      %p61 = scmp.eq.s32.totalorder %s18, 1
      %p62 = por %p60, %p61
      %p64 = scmp.ne.s32.totalorder %s49, %s63
      %p65 = scmp.eq.s32.totalorder %s18, 0
      %p66 = por %p64, %p65
      %s68 = sadd.s32 %s67, 1
      %p71 = scmp.eq.s32.totalorder %s12, 1
      %p72 = scmp.ne.s32.totalorder %s67, %s69
      %p73 = scmp.eq.s32.totalorder %s12, 0
      %p74 = por %p72, %p73
      %p75 = scmp.ne.s32.totalorder %s67, %s69
      %p76 = scmp.eq.s32.totalorder %s17, 1
      %p77 = por %p75, %p76
      %p78 = scmp.ne.s32.totalorder %s69, %s70
      %p79 = scmp.eq.s32.totalorder %s17, 0
      %p80 = por %p78, %p79
      %p81 = scmp.ne.s32.totalorder %s69, %s70
      %p82 = scmp.eq.s32.totalorder %s18, 1
      %p83 = por %p81, %p82
      %p85 = scmp.ne.s32.totalorder %s70, %s84
      %p86 = scmp.eq.s32.totalorder %s18, 0
      %p87 = por %p85, %p86
      %s89 = sadd.s32 %s88, 1
      %p92 = scmp.eq.s32.totalorder %s12, 1
      %p93 = scmp.ne.s32.totalorder %s88, %s90
      %p94 = scmp.eq.s32.totalorder %s12, 0
      %p95 = por %p93, %p94
      %p96 = scmp.ne.s32.totalorder %s88, %s90
      %p97 = scmp.eq.s32.totalorder %s17, 1
      %p98 = por %p96, %p97
      %p99 = scmp.ne.s32.totalorder %s90, %s91
      %p100 = scmp.eq.s32.totalorder %s17, 0
      %p101 = por %p99, %p100
      %p102 = scmp.ne.s32.totalorder %s90, %s91
      %p103 = scmp.eq.s32.totalorder %s18, 1
      %p104 = por %p102, %p103
      %p106 = scmp.ne.s32.totalorder %s91, %s105
      %p107 = scmp.eq.s32.totalorder %s18, 0
      %p108 = por %p106, %p107
      %s110 = sadd.s32 %s109, 1
      %p113 = scmp.eq.s32.totalorder %s12, 1
      %p114 = scmp.ne.s32.totalorder %s109, %s111
      %p115 = scmp.eq.s32.totalorder %s12, 0
      %p116 = por %p114, %p115
      %p117 = scmp.ne.s32.totalorder %s109, %s111
      %p118 = scmp.eq.s32.totalorder %s17, 1
      %p119 = por %p117, %p118
      %p120 = scmp.ne.s32.totalorder %s111, %s112
      %p121 = scmp.eq.s32.totalorder %s17, 0
      %p122 = por %p120, %p121
      %p123 = scmp.ne.s32.totalorder %s111, %s112
      %p124 = scmp.eq.s32.totalorder %s18, 1
      %p125 = por %p123, %p124
      %p127 = scmp.ne.s32.totalorder %s112, %s126
      %p128 = scmp.eq.s32.totalorder %s18, 0
      %p129 = por %p127, %p128
      %s130 = ssub.s32 %s12, %s19
      %p131 = scmp.eq.s32.totalorder %s130, 0
      %s133 = sadd.s32 %s132, 1
      %s134 = scalar_select %p131, %s132, %s133
      %p137 = pneg %p131
      %p138 = scmp.eq.s32.totalorder %s12, 1
      %p139 = por %p137, %p138
      %p140 = scmp.ne.s32.totalorder %s132, %s135
      %p141 = scmp.eq.s32.totalorder %s12, 0
      %p142 = por %p140, %p141
      %p143 = scmp.ne.s32.totalorder %s132, %s135
      %p144 = scmp.eq.s32.totalorder %s17, 1
      %p145 = por %p143, %p144
      %p146 = scmp.ne.s32.totalorder %s135, %s136
      %p147 = scmp.eq.s32.totalorder %s17, 0
      %p148 = por %p146, %p147
      %p149 = scmp.ne.s32.totalorder %s135, %s136
      %p150 = scmp.eq.s32.totalorder %s18, 1
      %p151 = por %p149, %p150
      %p153 = scmp.ne.s32.totalorder %s136, %s152
      %p154 = scmp.eq.s32.totalorder %s18, 0
      %p155 = por %p153, %p154
      %s156 = ssub.s32 %s12, %s19
      %p157 = scmp.eq.s32.totalorder %s156, 0
      %s159 = sadd.s32 %s158, 1
      %s160 = scalar_select %p157, %s158, %s159
      %p163 = pneg %p157
      %p164 = scmp.eq.s32.totalorder %s12, 1
      %p165 = por %p163, %p164
      %p166 = scmp.ne.s32.totalorder %s158, %s161
      %p167 = scmp.eq.s32.totalorder %s12, 0
      %p168 = por %p166, %p167
      %p169 = scmp.ne.s32.totalorder %s158, %s161
      %p170 = scmp.eq.s32.totalorder %s17, 1
      %p171 = por %p169, %p170
      %p172 = scmp.ne.s32.totalorder %s161, %s162
      %p173 = scmp.eq.s32.totalorder %s17, 0
      %p174 = por %p172, %p173
      %p175 = scmp.ne.s32.totalorder %s161, %s162
      %p176 = scmp.eq.s32.totalorder %s18, 1
      %p177 = por %p175, %p176
      %p179 = scmp.ne.s32.totalorder %s162, %s178
      %p180 = scmp.eq.s32.totalorder %s18, 0
      %p181 = por %p179, %p180
      %p182 = scmp.le.s32.totalorder 1, %s12
      %p183 = scmp.lt.s32.totalorder %s12, 3
      %p184 = pnand %p182, %p183
      %p185 = pneg %p184
      // Predicated region
      $region9: #{hmlp_wo_rin_forward.1} parent=5 // pred_check
        _
      $region10: #{hmlp_wo_rin_forward.1} parent=5 // pred_check_branch
        %187 = sbr.rel (%p184) target = $region12
      $region11: #{hmlp_wo_rin_forward.1} parent=5 // pred_region
        %s188 = ssub.s32 %s12, 1
        // Predicated region
        $region13: #{hmlp_wo_rin_forward.1} parent=11 // pred_check
          %p189 = pneg %p59
        $region14: #{hmlp_wo_rin_forward.1} parent=11 // pred_check_branch
          %191 = sbr.rel (%p189) target = $region16
        $region15: #{hmlp_wo_rin_forward.1} parent=11 // pred_region
          _
        $region16: #{hmlp_wo_rin_forward.1} parent=11 // pred_fallthru
          _
        // Predicated region
        $region17: #{hmlp_wo_rin_forward.1} parent=11 // pred_check
          %p192 = pneg %p80
        $region18: #{hmlp_wo_rin_forward.1} parent=11 // pred_check_branch
          %194 = sbr.rel (%p192) target = $region20
        $region19: #{hmlp_wo_rin_forward.1} parent=11 // pred_region
          _
        $region20: #{hmlp_wo_rin_forward.1} parent=11 // pred_fallthru
          _
        // Predicated region
        $region21: #{hmlp_wo_rin_forward.1} parent=11 // pred_check
          %p195 = pneg %p101
        $region22: #{hmlp_wo_rin_forward.1} parent=11 // pred_check_branch
          %197 = sbr.rel (%p195) target = $region24
        $region23: #{hmlp_wo_rin_forward.1} parent=11 // pred_region
          _
        $region24: #{hmlp_wo_rin_forward.1} parent=11 // pred_fallthru
          _
        // Predicated region
        $region25: #{hmlp_wo_rin_forward.1} parent=11 // pred_check
          %p198 = pneg %p122
        $region26: #{hmlp_wo_rin_forward.1} parent=11 // pred_check_branch
          %200 = sbr.rel (%p198) target = $region28
        $region27: #{hmlp_wo_rin_forward.1} parent=11 // pred_region
          _
        $region28: #{hmlp_wo_rin_forward.1} parent=11 // pred_fallthru
          _
      $region12: #{hmlp_wo_rin_forward.1} parent=5 // pred_fallthru
        _
      %p201 = scmp.lt.s32.totalorder %s12, 2
      // Predicated region
      $region29: #{hmlp_wo_rin_forward.1} parent=5 // pred_check
        %p202 = pneg %p201
      $region30: #{hmlp_wo_rin_forward.1} parent=5 // pred_check_branch
        %204 = sbr.rel (%p202) target = $region32
      $region31: #{hmlp_wo_rin_forward.1} parent=5 // pred_region
        // Predicated region
        $region33: #{hmlp_wo_rin_forward.1} parent=31 // pred_check
          %p205 = pneg %p32
        $region34: #{hmlp_wo_rin_forward.1} parent=31 // pred_check_branch
          %207 = sbr.rel (%p205) target = $region36
        $region35: #{hmlp_wo_rin_forward.1} parent=31 // pred_region
          %p208 = scmp.lt.s32.totalorder %s12, 1
          %s209 = scalar_select %p208, %s12, 1
          %s210 = smul.addr %s209, 8
          %s211 = scalar_lea.vmem %s0, %s210
        $region36: #{hmlp_wo_rin_forward.1} parent=31 // pred_fallthru
          _
        // Predicated region
        $region37: #{hmlp_wo_rin_forward.1} parent=31 // pred_check
          %p212 = pneg %p142
        $region38: #{hmlp_wo_rin_forward.1} parent=31 // pred_check_branch
          %214 = sbr.rel (%p212) target = $region40
        $region39: #{hmlp_wo_rin_forward.1} parent=31 // pred_region
          %s215 = sand.u32 %s132, 1
          %s216 = sand.u32 %s132, 1
          %s217 = smul.addr %s216, 32
          %s218 = scalar_lea.vmem [#allocation2], %s217
          %s219 = smul.addr %s12, 8
          %s220 = scalar_lea.vmem %s5, %s219
          // Predicated region
          $region41: #{hmlp_wo_rin_forward.1} parent=39 // pred_check
            _
          $region42: #{hmlp_wo_rin_forward.1} parent=39 // pred_check_branch
            %222 = sbr.rel (0) target = $region44
          $region43: #{hmlp_wo_rin_forward.1} parent=39 // pred_region
            // Predicated region
            $region45: #{hmlp_wo_rin_forward.1} parent=43 // pred_check
              _
            $region46: #{hmlp_wo_rin_forward.1} parent=43 // pred_check_branch
              %224 = sbr.rel (0) target = $region48
            $region47: #{hmlp_wo_rin_forward.1} parent=43 // pred_region
              // Predicated region
              $region60: #{hmlp_wo_rin_forward.1} parent=47 // pred_check
                _
              $region61: #{hmlp_wo_rin_forward.1} parent=47 // pred_check_branch
                %245 = sbr.rel (0) target = $region63
              $region62: #{hmlp_wo_rin_forward.1} parent=47 // pred_region
                loop: start=0, step=1, limit=1
                $region64: #{hmlp_wo_rin_forward.1} parent=62 // loop_pre_header
                  _
                $region65: #{hmlp_wo_rin_forward.1} parent=62 // loop_header
                  %s247 = sphi 0, %s251
                  %p248 = scmp.ge.s32.totalorder %s247, 1
                  %s252 = sphi %s220, %s220
                  %s253 = sphi %s218, %s218
                $region66: #{hmlp_wo_rin_forward.1} parent=62 // loop_header_branch
                  %250 = sbr.rel (%p248) target = $region70
                $region67: #{hmlp_wo_rin_forward.1} parent=62 // loop_body
                  %v254 = vld [vmem:[%s252] sm:$0xff]
                  %255 = vst [vmem:[%s253] sm:$0xff] %v254
                  %v256 = vld [vmem:[%s252 + $0x10] sm:$0xff]
                  %257 = vst [vmem:[%s253 + $0x8] sm:$0xff] %v256
                  %v258 = vld [vmem:[%s252 + $0x20] sm:$0xff]
                  %259 = vst [vmem:[%s253 + $0x10] sm:$0xff] %v258
                  %v260 = vld [vmem:[%s252 + $0x30] sm:$0xff]
                  %261 = vst [vmem:[%s253 + $0x18] sm:$0xff] %v260
                $region68: #{hmlp_wo_rin_forward.1} parent=62 // loop_footer
                  %s251 = sadd.s32 1, %s247
                $region69: #{hmlp_wo_rin_forward.1} parent=62 // loop_footer_branch
                  %246 = sbr.rel target = $region65
                $region70: #{hmlp_wo_rin_forward.1} parent=62 // loop_exit
                  _
              $region63: #{hmlp_wo_rin_forward.1} parent=47 // pred_fallthru
                _
              // Predicated region
              $region71: #{hmlp_wo_rin_forward.1} parent=47 // pred_check
                _
              $region72: #{hmlp_wo_rin_forward.1} parent=47 // pred_check_branch
                %263 = sbr.rel target = $region74
              $region73: #{hmlp_wo_rin_forward.1} parent=47 // pred_region
                _
              $region74: #{hmlp_wo_rin_forward.1} parent=47 // pred_fallthru
                _
            $region48: #{hmlp_wo_rin_forward.1} parent=43 // pred_fallthru
              _
            // Predicated region
            $region49: #{hmlp_wo_rin_forward.1} parent=43 // pred_check
              _
            $region50: #{hmlp_wo_rin_forward.1} parent=43 // pred_check_branch
              %226 = sbr.rel target = $region52
            $region51: #{hmlp_wo_rin_forward.1} parent=43 // pred_region
              loop: start=0, step=1, limit=1
              $region53: #{hmlp_wo_rin_forward.1} parent=51 // loop_pre_header
                _
              $region54: #{hmlp_wo_rin_forward.1} parent=51 // loop_header
                %s229 = sphi 0, %s233
                %p230 = scmp.ge.s32.totalorder %s229, 1
                %s234 = sphi %s220, %s220
                %s235 = sphi %s218, %s218
              $region55: #{hmlp_wo_rin_forward.1} parent=51 // loop_header_branch
                %232 = sbr.rel (%p230) target = $region59
              $region56: #{hmlp_wo_rin_forward.1} parent=51 // loop_body
                %v236 = vld [vmem:[%s234] sm:$0xff]
                %237 = vst [vmem:[%s235] sm:$0xff] %v236
                %v238 = vld [vmem:[%s234 + $0x10] sm:$0xff]
                %239 = vst [vmem:[%s235 + $0x8] sm:$0xff] %v238
                %v240 = vld [vmem:[%s234 + $0x20] sm:$0xff]
                %241 = vst [vmem:[%s235 + $0x10] sm:$0xff] %v240
                %v242 = vld [vmem:[%s234 + $0x30] sm:$0xff]
                %243 = vst [vmem:[%s235 + $0x18] sm:$0xff] %v242
              $region57: #{hmlp_wo_rin_forward.1} parent=51 // loop_footer
                %s233 = sadd.s32 1, %s229
              $region58: #{hmlp_wo_rin_forward.1} parent=51 // loop_footer_branch
                %228 = sbr.rel target = $region54
              $region59: #{hmlp_wo_rin_forward.1} parent=51 // loop_exit
                _
            $region52: #{hmlp_wo_rin_forward.1} parent=43 // pred_fallthru
              _
          $region44: #{hmlp_wo_rin_forward.1} parent=39 // pred_fallthru
            _
          %264 = vnop
        $region40: #{hmlp_wo_rin_forward.1} parent=31 // pred_fallthru
          _
      $region32: #{hmlp_wo_rin_forward.1} parent=5 // pred_fallthru
        _
      %p265 = scmp.le.s32.totalorder 1, %s12
      %p266 = scmp.lt.s32.totalorder %s12, 3
      %p267 = pnand %p265, %p266
      %p268 = pneg %p267
      // Predicated region
      $region75: #{hmlp_wo_rin_forward.1} parent=5 // pred_check
        _
      $region76: #{hmlp_wo_rin_forward.1} parent=5 // pred_check_branch
        %270 = sbr.rel (%p267) target = $region78
      $region77: #{hmlp_wo_rin_forward.1} parent=5 // pred_region
        %s271 = ssub.s32 %s12, 1
        %s272 = sand.u32 %s135, 1
        %s273 = sand.u32 %s135, 1
        %s274 = smul.addr %s273, 32
        %s275 = scalar_lea.vmem [#allocation2], %s274
        // Predicated region
        $region79: #{hmlp_wo_rin_forward.1} parent=77 // pred_check
          %p276 = pneg %p148
        $region80: #{hmlp_wo_rin_forward.1} parent=77 // pred_check_branch
          %278 = sbr.rel (%p276) target = $region82
        $region81: #{hmlp_wo_rin_forward.1} parent=77 // pred_region
          _
        $region82: #{hmlp_wo_rin_forward.1} parent=77 // pred_fallthru
          _
        %p279 = scmp.lt.s32.totalorder %s17, 1
        %s280 = scalar_select %p279, %s17, 1
        %s281 = smul.addr %s280, 8
        %s282 = scalar_lea.vmem %s0, %s281
        %p283 = pneg %p38
        %p284 = pneg %p35
        %p285 = pneg %p59
        %p286 = pneg %p56
        %p287 = pneg %p80
        %p288 = pneg %p77
        %p289 = pneg %p101
        %p290 = pneg %p98
        %p291 = pneg %p122
        %p292 = pneg %p119
        %s293 = sand.u32 %s135, 1
        %s294 = sand.u32 %s135, 1
        %s295 = smul.addr %s294, 32
        %s296 = scalar_lea.vmem [#allocation2], %s295
        %p297 = pneg %p148
        %p298 = pneg %p145
        %p299 = pneg %p174
        %p300 = pneg %p171
        %p301 = scmp.lt.s32.totalorder %s17, 1
        %s302 = scalar_select %p301, %s17, 1
        %s303 = smul.addr %s302, 8
        %s304 = scalar_lea.vmem %s6, %s303
        %p305 = scmp.lt.s32.totalorder %s17, 1
        %s306 = scalar_select %p305, %s17, 1
        %s307 = smul.addr %s306, 8
        %s308 = scalar_lea.vmem %s0, %s307
        %p309 = scmp.lt.s32.totalorder %s17, 1
        %s310 = scalar_select %p309, %s17, 1
        %s311 = smul.addr %s310, 8
        %s312 = scalar_lea.vmem %s6, %s311
        %v313 = vld [vmem:[%s308] sm:$0xff]
        %v314 = vld [vmem:[%s1] sm:$0xff]
        %v315 = vld [vmem:[%s1 + $0x8] sm:$0xff]
        %v316 = vld [vmem:[%s1 + $0x10] sm:$0xff]
        %v317 = vld [vmem:[%s1 + $0x18] sm:$0xff]
        %v318 = vld [vmem:[%s1 + $0x20] sm:$0xff]
        %v319 = vld [vmem:[%s1 + $0x28] sm:$0xff]
        %v320 = vld [vmem:[%s1 + $0x30] sm:$0xff]
        %v321 = vld [vmem:[%s1 + $0x38] sm:$0xff]
        %v322 = vld [vmem:[%s1 + $0x40] sm:$0xff]
        %v323 = vld [vmem:[%s1 + $0x48] sm:$0xff]
        %v324 = vld [vmem:[%s1 + $0x50] sm:$0xff]
        %v325 = vld [vmem:[%s1 + $0x58] sm:$0xff]
        %v326 = vld [vmem:[%s1 + $0x60] sm:$0xff]
        %v327 = vld [vmem:[%s1 + $0x68] sm:$0xff]
        %v328 = vld [vmem:[%s1 + $0x70] sm:$0xff]
        %v329 = vld [vmem:[%s1 + $0x78] sm:$0xff]
        %vm330 = vcmask 523264
        %v332 = vsel %vm330, %v313, 0
        %334 = vmatprep.subr.mxu0 %v315
        %335 = vmatpush1.msra.mxu0 %v314
        %336 = vmatprep.subr.mxu0 %v317
        %337 = vmatpush1.msra.mxu0 %v316
        %338 = vmatprep.subr.mxu0 %v319
        %339 = vmatpush1.msra.mxu0 %v318
        %340 = vmatprep.subr.mxu0 %v321
        %341 = vmatpush1.msra.mxu0 %v320
        %342 = vmatprep.subr.mxu0 %v323
        %343 = vmatpush1.msra.mxu0 %v322
        %344 = vmatprep.subr.mxu0 %v325
        %345 = vmatpush1.msra.mxu0 %v324
        %346 = vmatprep.subr.mxu0 %v327
        %347 = vmatpush1.msra.mxu0 %v326
        %348 = vmatprep.subr.mxu0 %v329
        %349 = vmatpush1.msra.mxu0 %v328
        %350 = vmatprep.subr.mxu0 0.0
        %351 = vmatpush1.msra.mxu0 0.0
        %352 = vmatprep.subr.mxu0 0.0
        %353 = vmatpush1.msra.mxu0 0.0
        %354 = vmatprep.subr.mxu0 0.0
        %355 = vmatpush1.msra.mxu0 0.0
        %356 = vmatprep.subr.mxu0 0.0
        %357 = vmatpush1.msra.mxu0 0.0
        %358 = vmatprep.subr.mxu0 0.0
        %359 = vmatpush1.msra.mxu0 0.0
        %360 = vmatprep.subr.mxu0 0.0
        %361 = vmatpush1.msra.mxu0 0.0
        %362 = vmatprep.subr.mxu0 0.0
        %363 = vmatpush1.msra.mxu0 0.0
        %364 = vmatprep.subr.mxu0 0.0
        %365 = vmatpush1.msra.mxu0 0.0
        %366 = vmatprep.subr.mxu0 0.0
        %367 = vmatpush1.msra.mxu0 0.0
        %368 = vmatprep.subr.mxu0 0.0
        %369 = vmatpush1.msra.mxu0 0.0
        %370 = vmatprep.subr.mxu0 0.0
        %371 = vmatpush1.msra.mxu0 0.0
        %372 = vmatprep.subr.mxu0 0.0
        %373 = vmatpush1.msra.mxu0 0.0
        %374 = vmatprep.subr.mxu0 0.0
        %375 = vmatpush1.msra.mxu0 0.0
        %376 = vmatprep.subr.mxu0 0.0
        %377 = vmatpush1.msra.mxu0 0.0
        %378 = vmatprep.subr.mxu0 0.0
        %379 = vmatpush1.msra.mxu0 0.0
        %380 = vmatprep.subr.mxu0 0.0
        %381 = vmatpush1.msra.mxu0 0.0
        %382 = vmatprep.subr.mxu0 0.0
        %383 = vmatpush1.msra.mxu0 0.0
        %384 = vmatprep.subr.mxu0 0.0
        %385 = vmatpush1.msra.mxu0 0.0
        %386 = vmatprep.subr.mxu0 0.0
        %387 = vmatpush1.msra.mxu0 0.0
        %388 = vmatprep.subr.mxu0 0.0
        %389 = vmatpush1.msra.mxu0 0.0
        %390 = vmatprep.subr.mxu0 0.0
        %391 = vmatpush1.msra.mxu0 0.0
        %392 = vmatprep.subr.mxu0 0.0
        %393 = vmatpush1.msra.mxu0 0.0
        %394 = vmatprep.subr.mxu0 0.0
        %395 = vmatpush1.msra.mxu0 0.0
        %396 = vmatprep.subr.mxu0 0.0
        %397 = vmatpush1.msra.mxu0 0.0
        %398 = vmatprep.mubr.f32.mxu0 0.0
        %399 = vmatmul.mubr.f32.gmra.mrb[0].mxu0 %v332
        %v400 = vpop.f32.mrb[0].mxu0
        %v401 = vadd.f32 0.0, %v400
        %v402 = vpop.f32.mrb[0].mxu0
        %v403 = vadd.f32 0.0, %v402
        %404 = vdwg.mxu0
        %v405 = vld [vmem:[%s275] sm:$0xff]
        %v406 = vld [vmem:[%s3] sm:$0x1]
        %408 = vset.pattern.permute.xlu0 0
        %409 = vperm.xlu0 %408, %v405
        %v410 = vpop.permute.xlu0 %409
        %v412 = vlaneseq
        %v413 = vshrl.u32 %v412, 7
        %v414 = vsub.s32 0, %v413
        %v415 = vrot.slane %v406, %v414
        %v416 = vmul.f32 %v410, %v415
        %v417 = vld [vmem:[%s3 + $0x1] sm:$0x1]
        %418 = vset.pattern.permute.xlu0 1
        %419 = vperm.xlu0 %418, %v405
        %v420 = vpop.permute.xlu0 %419
        %v422 = vlaneseq
        %v423 = vshrl.u32 %v422, 7
        %v424 = vsub.s32 0, %v423
        %v425 = vrot.slane %v417, %v424
        %v426 = vmul.f32 %v420, %v425
        %v427 = vadd.f32 %v416, %v426
        %v428 = vld [vmem:[%s3 + $0x2] sm:$0x1]
        %429 = vset.pattern.permute.xlu0 2
        %430 = vperm.xlu0 %429, %v405
        %v431 = vpop.permute.xlu0 %430
        %v433 = vlaneseq
        %v434 = vshrl.u32 %v433, 7
        %v435 = vsub.s32 0, %v434
        %v436 = vrot.slane %v428, %v435
        %v437 = vmul.f32 %v431, %v436
        %v438 = vadd.f32 %v427, %v437
        %v439 = vld [vmem:[%s3 + $0x3] sm:$0x1]
        %440 = vset.pattern.permute.xlu0 3
        %441 = vperm.xlu0 %440, %v405
        %v442 = vpop.permute.xlu0 %441
        %v444 = vlaneseq
        %v445 = vshrl.u32 %v444, 7
        %v446 = vsub.s32 0, %v445
        %v447 = vrot.slane %v439, %v446
        %v448 = vmul.f32 %v442, %v447
        %v449 = vadd.f32 %v438, %v448
        %v450 = vld [vmem:[%s4] sm:$0x1]
        %v451 = vlaneseq
        %v452 = vshrl.u32 %v451, 7
        %v453 = vsub.s32 0, %v452
        %v454 = vrot.slane %v450, %v453
        %v455 = vadd.f32 %v401, %v454
        %v456 = vmul.f32 %v449, %v455
        %s457 = scalar_lea.vmem %s275, 8 [#allocation2]
        %v458 = vld [vmem:[%s457] sm:$0xff]
        %460 = vset.pattern.permute.xlu0 0
        %461 = vperm.xlu0 %460, %v458
        %v462 = vpop.permute.xlu0 %461
        %v464 = vmul.f32 %v462, %v415
        %465 = vset.pattern.permute.xlu0 1
        %466 = vperm.xlu0 %465, %v458
        %v467 = vpop.permute.xlu0 %466
        %v469 = vmul.f32 %v467, %v425
        %v470 = vadd.f32 %v464, %v469
        %471 = vset.pattern.permute.xlu0 2
        %472 = vperm.xlu0 %471, %v458
        %v473 = vpop.permute.xlu0 %472
        %v475 = vmul.f32 %v473, %v436
        %v476 = vadd.f32 %v470, %v475
        %477 = vset.pattern.permute.xlu0 3
        %478 = vperm.xlu0 %477, %v458
        %v479 = vpop.permute.xlu0 %478
        %v481 = vmul.f32 %v479, %v447
        %v482 = vadd.f32 %v476, %v481
        %v483 = vld [vmem:[%s4 + $0x1] sm:$0x1]
        %v484 = vlaneseq
        %v485 = vshrl.u32 %v484, 7
        %v486 = vsub.s32 0, %v485
        %v487 = vrot.slane %v483, %v486
        %489 = vrot.lane.b32.xlu0 %v487, 64
        %v490 = vpop.permute.xlu0 %489
        %v492 = vadd.f32 %v401, %v490
        %494 = vrot.lane.b32.xlu0 %v492, 64
        %v495 = vpop.permute.xlu0 %494
        %v497 = vmul.f32 %v482, %v495
        %v498 = vadd.f32 %v456, %v497
        %s499 = scalar_lea.vmem %s275, 16 [#allocation2]
        %v500 = vld [vmem:[%s499] sm:$0xff]
        %502 = vset.pattern.permute.xlu0 0
        %503 = vperm.xlu0 %502, %v500
        %v504 = vpop.permute.xlu0 %503
        %v506 = vmul.f32 %v504, %v415
        %507 = vset.pattern.permute.xlu0 1
        %508 = vperm.xlu0 %507, %v500
        %v509 = vpop.permute.xlu0 %508
        %v511 = vmul.f32 %v509, %v425
        %v512 = vadd.f32 %v506, %v511
        %513 = vset.pattern.permute.xlu0 2
        %514 = vperm.xlu0 %513, %v500
        %v515 = vpop.permute.xlu0 %514
        %v517 = vmul.f32 %v515, %v436
        %v518 = vadd.f32 %v512, %v517
        %519 = vset.pattern.permute.xlu0 3
        %520 = vperm.xlu0 %519, %v500
        %v521 = vpop.permute.xlu0 %520
        %v523 = vmul.f32 %v521, %v447
        %v524 = vadd.f32 %v518, %v523
        %v525 = vld [vmem:[%s4 + $0x2] sm:$0x1]
        %v526 = vlaneseq
        %v527 = vshrl.u32 %v526, 7
        %v528 = vsub.s32 0, %v527
        %v529 = vrot.slane %v525, %v528
        %v530 = vadd.f32 %v403, %v529
        %v531 = vmul.f32 %v524, %v530
        %v532 = vadd.f32 %v498, %v531
        %s533 = scalar_lea.vmem %s275, 24 [#allocation2]
        %v534 = vld [vmem:[%s533] sm:$0xff]
        %536 = vset.pattern.permute.xlu0 0
        %537 = vperm.xlu0 %536, %v534
        %v538 = vpop.permute.xlu0 %537
        %v540 = vmul.f32 %v538, %v415
        %541 = vset.pattern.permute.xlu0 1
        %542 = vperm.xlu0 %541, %v534
        %v543 = vpop.permute.xlu0 %542
        %v545 = vmul.f32 %v543, %v425
        %v546 = vadd.f32 %v540, %v545
        %547 = vset.pattern.permute.xlu0 2
        %548 = vperm.xlu0 %547, %v534
        %v549 = vpop.permute.xlu0 %548
        %v551 = vmul.f32 %v549, %v436
        %v552 = vadd.f32 %v546, %v551
        %553 = vset.pattern.permute.xlu0 3
        %554 = vperm.xlu0 %553, %v534
        %v555 = vpop.permute.xlu0 %554
        %v557 = vmul.f32 %v555, %v447
        %v558 = vadd.f32 %v552, %v557
        %v559 = vld [vmem:[%s4 + $0x3] sm:$0x1]
        %v560 = vlaneseq
        %v561 = vshrl.u32 %v560, 7
        %v562 = vsub.s32 0, %v561
        %v563 = vrot.slane %v559, %v562
        %565 = vrot.lane.b32.xlu0 %v563, 64
        %v566 = vpop.permute.xlu0 %565
        %v568 = vadd.f32 %v403, %v566
        %570 = vrot.lane.b32.xlu0 %v568, 64
        %v571 = vpop.permute.xlu0 %570
        %v573 = vmul.f32 %v558, %v571
        %v574 = vadd.f32 %v532, %v573
        %v575 = vld [vmem:[%s2] sm:$0xff]
        %v576 = vld [vmem:[%s2 + $0x8] sm:$0xff]
        %v577 = vld [vmem:[%s2 + $0x10] sm:$0xff]
        %v578 = vld [vmem:[%s2 + $0x18] sm:$0xff]
        %v579 = vld [vmem:[%s2 + $0x20] sm:$0xff]
        %v580 = vld [vmem:[%s2 + $0x28] sm:$0xff]
        %v581 = vld [vmem:[%s2 + $0x30] sm:$0xff]
        %v582 = vld [vmem:[%s2 + $0x38] sm:$0xff]
        %v584 = vsel %vm330, %v574, 0
        %586 = vmatprep.subr.mxu0 0.0
        %587 = vmatpush1.msra.mxu0 %v575
        %588 = vmatprep.subr.mxu0 0.0
        %589 = vmatpush1.msra.mxu0 %v576
        %590 = vmatprep.subr.mxu0 0.0
        %591 = vmatpush1.msra.mxu0 %v577
        %592 = vmatprep.subr.mxu0 0.0
        %593 = vmatpush1.msra.mxu0 %v578
        %594 = vmatprep.subr.mxu0 0.0
        %595 = vmatpush1.msra.mxu0 %v579
        %596 = vmatprep.subr.mxu0 0.0
        %597 = vmatpush1.msra.mxu0 %v580
        %598 = vmatprep.subr.mxu0 0.0
        %599 = vmatpush1.msra.mxu0 %v581
        %600 = vmatprep.subr.mxu0 0.0
        %601 = vmatpush1.msra.mxu0 %v582
        %602 = vmatprep.subr.mxu0 0.0
        %603 = vmatpush1.msra.mxu0 0.0
        %604 = vmatprep.subr.mxu0 0.0
        %605 = vmatpush1.msra.mxu0 0.0
        %606 = vmatprep.subr.mxu0 0.0
        %607 = vmatpush1.msra.mxu0 0.0
        %608 = vmatprep.subr.mxu0 0.0
        %609 = vmatpush1.msra.mxu0 0.0
        %610 = vmatprep.subr.mxu0 0.0
        %611 = vmatpush1.msra.mxu0 0.0
        %612 = vmatprep.subr.mxu0 0.0
        %613 = vmatpush1.msra.mxu0 0.0
        %614 = vmatprep.subr.mxu0 0.0
        %615 = vmatpush1.msra.mxu0 0.0
        %616 = vmatprep.subr.mxu0 0.0
        %617 = vmatpush1.msra.mxu0 0.0
        %618 = vmatprep.subr.mxu0 0.0
        %619 = vmatpush1.msra.mxu0 0.0
        %620 = vmatprep.subr.mxu0 0.0
        %621 = vmatpush1.msra.mxu0 0.0
        %622 = vmatprep.subr.mxu0 0.0
        %623 = vmatpush1.msra.mxu0 0.0
        %624 = vmatprep.subr.mxu0 0.0
        %625 = vmatpush1.msra.mxu0 0.0
        %626 = vmatprep.subr.mxu0 0.0
        %627 = vmatpush1.msra.mxu0 0.0
        %628 = vmatprep.subr.mxu0 0.0
        %629 = vmatpush1.msra.mxu0 0.0
        %630 = vmatprep.subr.mxu0 0.0
        %631 = vmatpush1.msra.mxu0 0.0
        %632 = vmatprep.subr.mxu0 0.0
        %633 = vmatpush1.msra.mxu0 0.0
        %634 = vmatprep.subr.mxu0 0.0
        %635 = vmatpush1.msra.mxu0 0.0
        %636 = vmatprep.subr.mxu0 0.0
        %637 = vmatpush1.msra.mxu0 0.0
        %638 = vmatprep.subr.mxu0 0.0
        %639 = vmatpush1.msra.mxu0 0.0
        %640 = vmatprep.subr.mxu0 0.0
        %641 = vmatpush1.msra.mxu0 0.0
        %642 = vmatprep.subr.mxu0 0.0
        %643 = vmatpush1.msra.mxu0 0.0
        %644 = vmatprep.subr.mxu0 0.0
        %645 = vmatpush1.msra.mxu0 0.0
        %646 = vmatprep.subr.mxu0 0.0
        %647 = vmatpush1.msra.mxu0 0.0
        %648 = vmatprep.subr.mxu0 0.0
        %649 = vmatpush1.msra.mxu0 0.0
        %650 = vmatprep.mubr.f32.mxu0 0.0
        %651 = vmatmul.mubr.f32.gmra.mrb[0].mxu0 %v584
        %v652 = vpop.f32.mrb[0].mxu0
        %v653 = vadd.f32 0.0, %v652
        %v654 = vpop.f32.mrb[0].mxu0
        %655 = vdwg.mxu0
        %656 = vst.msk [vmem:[%s312] sm:$0xff] %vm330, %v653
        %p657 = scmp.lt.s32.totalorder %s17, 1
        %s658 = scalar_select %p657, %s17, 1
        %s659 = smul.addr %s658, 8
        %s660 = scalar_lea.vmem %s6, %s659
        // Predicated region
        $region83: #{hmlp_wo_rin_forward.1} parent=77 // pred_check
          %p661 = pneg %p171
        $region84: #{hmlp_wo_rin_forward.1} parent=77 // pred_check_branch
          %663 = sbr.rel (%p661) target = $region86
        $region85: #{hmlp_wo_rin_forward.1} parent=77 // pred_region
          _
        $region86: #{hmlp_wo_rin_forward.1} parent=77 // pred_fallthru
          _
      $region78: #{hmlp_wo_rin_forward.1} parent=5 // pred_fallthru
        _
      %p664 = scmp.le.s32.totalorder 2, %s12
      // Predicated region
      $region87: #{hmlp_wo_rin_forward.1} parent=5 // pred_check
        %p665 = pneg %p664
      $region88: #{hmlp_wo_rin_forward.1} parent=5 // pred_check_branch
        %667 = sbr.rel (%p665) target = $region90
      $region89: #{hmlp_wo_rin_forward.1} parent=5 // pred_region
        %s668 = ssub.s32 %s12, 2
        // Predicated region
        $region91: #{hmlp_wo_rin_forward.1} parent=89 // pred_check
          %p669 = pneg %p177
        $region92: #{hmlp_wo_rin_forward.1} parent=89 // pred_check_branch
          %671 = sbr.rel (%p669) target = $region94
        $region93: #{hmlp_wo_rin_forward.1} parent=89 // pred_region
          %p672 = scmp.lt.s32.totalorder %s18, 1
          %s673 = scalar_select %p672, %s18, 1
          %s674 = smul.addr %s673, 8
          %s675 = scalar_lea.vmem %s6, %s674
        $region94: #{hmlp_wo_rin_forward.1} parent=89 // pred_fallthru
          _
      $region90: #{hmlp_wo_rin_forward.1} parent=5 // pred_fallthru
        _
    $region6: #{hmlp_wo_rin_forward.1} parent=1 // loop_footer
      %s16 = sadd.s32 1, %s12
    $region7: #{hmlp_wo_rin_forward.1} parent=1 // loop_footer_branch
      %11 = sbr.rel target = $region3
    $region8: #{hmlp_wo_rin_forward.1} parent=1 // loop_exit
      _

</llo_original>
